<compile_context>
chip_gen: v7x
topology: tpu7x:2x2x1
jax: 0.10.0
libtpu: 0.0.40
codegen_flags: <defaults>
</compile_context>

<pallas_src>
import math
import functools

import jax
import jax.numpy as jnp
from jax.experimental import pallas as pl
from jax.experimental.pallas import tpu as pltpu


# ----------------------------------------------------------------------------
# Tiling / VMEM planning
# ----------------------------------------------------------------------------
def _divisor_tiles(n, quantum):
    """Tile sizes for a dim of size n: n itself plus every multiple of
    `quantum` that divides n, descending."""
    tiles = {n}
    t = quantum
    while t < n:
        if n % t == 0:
            tiles.add(t)
        t += quantum
    return sorted(tiles, reverse=True)


def _q_tile_candidates(s, cap=512):
    tiles = [t for t in _divisor_tiles(s, 8) if t <= cap]
    return tiles or [min(s, cap)]


def _vmem_budget(frac=0.75):
    """Per-generation VMEM budget (~75% of capacity; v5e/v6e 128 MiB,
    v7x 64 MiB).  Conservative fallback if the query is unavailable."""
    cap = 64 << 20
    try:
        cap = int(pltpu.get_tpu_info().vmem_capacity_bytes)
    except Exception:
        pass
    return int(min(max(cap * frac, 32 << 20), 120 << 20))


def _plan_tiles(S, D, H, dkv, cbytes, budget, q_tile=None, kv_tile=None):
    """Pick (tq, tk, tn1, tn3) so every kernel's resident set (double-buffered
    blocks + scratch + f32 scores/exp intermediates) fits the VMEM budget."""
    inner = H * dkv
    w3 = 3 * inner

    def k1_bytes(tq, tn):           # norm + fused QKV
        return (2 * (tq * D * 4 + D * tn * cbytes + tq * tn * cbytes)
                + tq * (D + tn) * 4 + 2 * D * 4)

    def k2_bytes(tq, tk):           # flash attention (per head)
        return (2 * ((tq + 2 * tk) * dkv * cbytes + tq * tk * cbytes
                     + tq * dkv * cbytes)
                + tq * (dkv + 2) * 4          # m / l / acc scratch
                + 2 * tq * tk * 4)            # f32 scores + exp intermediates

    def k3_bytes(tq, tn):           # out-proj + residual
        return (2 * (tq * inner * cbytes + inner * tn * cbytes
                     + 2 * tq * tn * 4) + tq * tn * 4)

    q_cands = [min(q_tile, S)] if q_tile else _q_tile_candidates(S)
    kv_cands = _divisor_tiles(S, 128)
    if kv_tile and S % kv_tile == 0 and (kv_tile % 128 == 0 or kv_tile == S):
        kv_cands = [t for t in kv_cands if t <= kv_tile] or [kv_tile]
    c1_cands = _divisor_tiles(w3, 128)
    c3_cands = _divisor_tiles(D, 128)

    for tq in q_cands:
        tn1 = next((t for t in c1_cands if k1_bytes(tq, t) <= budget),
                   c1_cands[-1])
        tn3 = next((t for t in c3_cands if k3_bytes(tq, t) <= budget),
                   c3_cands[-1])
        tk = next((t for t in kv_cands if k2_bytes(tq, t) <= budget),
                  kv_cands[-1])
        if (k1_bytes(tq, tn1) <= budget and k2_bytes(tq, tk) <= budget
                and k3_bytes(tq, tn3) <= budget):
            return tq, tk, tn1, tn3
    # Nothing fits cleanly: take the smallest candidates and let Mosaic cope.
    return q_cands[-1], kv_cands[-1], c1_cands[-1], c3_cands[-1]


# ----------------------------------------------------------------------------
# Kernel 1: RMS layer-norm + fused QKV projection (column-tiled wide GEMM).
# ----------------------------------------------------------------------------
def _norm_qkv_kernel(hid_ref, lnw_ref, w_ref, out_ref, *, eps):
    x = hid_ref[...]                                        # (tq, D) f32
    var = jnp.mean(x * x, axis=-1, keepdims=True)
    norm = x * jax.lax.rsqrt(var + eps) * lnw_ref[0]        # f32 elementwise
    out_ref[...] = jnp.dot(norm.astype(w_ref.dtype), w_ref[...],
                           preferred_element_type=jnp.float32
                           ).astype(out_ref.dtype)          # (tq, tn1)


# ----------------------------------------------------------------------------
# Kernel 2: per-head flash-style attention (online softmax over KV tiles).
# ----------------------------------------------------------------------------
def _attn_kernel(q_ref, k_ref, v_ref, bias_ref, o_ref, m_ref, l_ref, acc_ref):
    kv = pl.program_id(3)
    nk = pl.num_programs(3)

    @pl.when(kv == 0)
    def _():
        m_ref[...] = jnp.full_like(m_ref, -jnp.inf)
        l_ref[...] = jnp.zeros_like(l_ref)
        acc_ref[...] = jnp.zeros_like(acc_ref)

    # scores = q @ k^T  (T5: no 1/sqrt(d) scaling), f32 MXU accumulation.
    s = jax.lax.dot_general(q_ref[...], k_ref[...],
                            (((1,), (1,)), ((), ())),
                            preferred_element_type=jnp.float32)   # (tq, tk)
    s = s + bias_ref[...].astype(jnp.float32)                     # bf16 -> f32

    m_prev = m_ref[...]
    m_new = jnp.maximum(m_prev, jnp.max(s, axis=-1, keepdims=True))
    alpha = jnp.exp(m_prev - m_new)
    p = jnp.exp(s - m_new)
    l_ref[...] = alpha * l_ref[...] + jnp.sum(p, axis=-1, keepdims=True)
    acc_ref[...] = alpha * acc_ref[...] + jnp.dot(
        p.astype(v_ref.dtype), v_ref[...], preferred_element_type=jnp.float32)
    m_ref[...] = m_new

    @pl.when(kv == nk - 1)
    def _():
        o_ref[...] = (acc_ref[...] *
                      pl.reciprocal(l_ref[...], approx=True)).astype(o_ref.dtype)


# ----------------------------------------------------------------------------
# Kernel 3: output projection (column-tiled) + residual add.
# ----------------------------------------------------------------------------
def _out_proj_kernel(ctx_ref, wo_ref, hid_ref, out_ref):
    attn = jnp.dot(ctx_ref[...], wo_ref[...],
                   preferred_element_type=jnp.float32)            # (tq, tn3)
    out_ref[...] = hid_ref[...] + attn


# ----------------------------------------------------------------------------
# Relative position bias (plain-JAX glue, matches T5Attention.compute_bias).
# ----------------------------------------------------------------------------
def _relative_position_bucket(relative_position, bidirectional=True,
                              num_buckets=32, max_distance=128):
    ret = jnp.zeros_like(relative_position)
    n = -relative_position
    if bidirectional:
        num_buckets //= 2
        ret = ret + (n < 0).astype(jnp.int32) * num_buckets
        n = jnp.abs(n)
    else:
        n = jnp.maximum(n, 0)
    max_exact = num_buckets // 2
    is_small = n < max_exact
    n_safe = jnp.maximum(n, 1)          # guard log(0); masked by is_small anyway
    val_if_large = max_exact + (
        jnp.log(n_safe.astype(jnp.float32) / max_exact)
        / math.log(max_distance / max_exact)
        * (num_buckets - max_exact)
    ).astype(jnp.int32)
    val_if_large = jnp.minimum(val_if_large, num_buckets - 1)
    ret = ret + jnp.where(is_small, n, val_if_large)
    return ret


def compute_position_bias(rel_attn_bias_table, qlen, klen, *, is_decoder,
                          num_buckets):
    context_position = jnp.arange(qlen, dtype=jnp.int32)[:, None]
    memory_position = jnp.arange(klen, dtype=jnp.int32)[None, :]
    relative_position = memory_position - context_position           # (q, k)
    rp_bucket = _relative_position_bucket(
        relative_position, bidirectional=not is_decoder,
        num_buckets=num_buckets)
    values = rel_attn_bias_table[rp_bucket]                           # (q, k, H)
    values = jnp.transpose(values, (2, 0, 1))                         # (H, q, k)
    return values.astype(jnp.float32)


# ----------------------------------------------------------------------------
# Wrapper
# ----------------------------------------------------------------------------
def t5_layer_self_attention(hidden, params, *, n_heads, d_kv, eps=1e-6,
                            num_buckets=32, is_decoder=False, use_bf16=True,
                            q_tile=None, kv_tile=None):
    B, S, D = hidden.shape
    H = n_heads
    inner = H * d_kv
    cdt = jnp.bfloat16 if use_bf16 else jnp.float32       # MXU operand dtype
    cbytes = jnp.dtype(cdt).itemsize

    # Module runs in f32; keep the residual stream f32 (exact add).
    hidden = hidden.astype(jnp.float32)
    ln_w = params["ln_w"].reshape(1, D).astype(jnp.float32)
    w_qkv = jnp.concatenate([params["wq"], params["wk"], params["wv"]],
                            axis=1).astype(cdt)                     # (D, 3*inner)
    wo = params["wo"].astype(cdt)                                   # (inner, D)

    bias_f32 = compute_position_bias(params["rel_bias"], S, S,
                                     is_decoder=is_decoder,
                                     num_buckets=num_buckets)       # (H,S,S)
    bias_c = bias_f32.astype(cdt)  # halve the dominant attention DMA stream
    # TODO(synk): attention_mask support -- add the broadcast mask to the bias
    # (making it per-batch) and index the bias BlockSpec by batch as well.

    budget = _vmem_budget()
    tq, tk, tn1, tn3 = _plan_tiles(S, D, H, d_kv, cbytes, budget,
                                   q_tile=q_tile, kv_tile=kv_tile)
    nq, nk = pl.cdiv(S, tq), S // tk
    nc1, nc3 = pl.cdiv(3 * inner, tn1), pl.cdiv(D, tn3)

    # ---- Kernel 1: norm + fused QKV -------------------------------------
    qkv = pl.pallas_call(
        functools.partial(_norm_qkv_kernel, eps=eps),
        out_shape=jax.ShapeDtypeStruct((B, S, 3 * inner), cdt),
        grid=(B, nq, nc1),
        in_specs=[
            pl.BlockSpec((None, tq, D), lambda b, qi, c: (b, qi, 0)),
            pl.BlockSpec((1, D), lambda b, qi, c: (0, 0)),
            pl.BlockSpec((D, tn1), lambda b, qi, c: (0, c)),
        ],
        out_specs=pl.BlockSpec((None, tq, tn1), lambda b, qi, c: (b, qi, c)),
        compiler_params=pltpu.CompilerParams(
            dimension_semantics=("parallel", "parallel", "parallel"),
            vmem_limit_bytes=budget),
    )(hidden, ln_w, w_qkv)

    # View the fused minor dim as (3, H, d_kv) so Kernel 2 can gather per-head
    # Q/K/V with strided BlockSpec DMA -- no host-side HBM transpose passes.
    qkv5 = qkv.reshape(B, S, 3, H, d_kv)

    # ---- Kernel 2: per-head flash attention ------------------------------
    # Grid order (H, Sq, B, KV): KV innermost for the online-softmax scratch;
    # batch next-innermost so the (tq, tk) bias tile (batch-independent) is
    # reused across batches whenever S fits a single KV tile.
    ctx = pl.pallas_call(
        _attn_kernel,
        out_shape=jax.ShapeDtypeStruct((B, S, H, d_kv), cdt),
        grid=(H, nq, B, nk),
        in_specs=[
            pl.BlockSpec((None, tq, None, None, d_kv),
                         lambda h, qi, b, kv: (b, qi, 0, h, 0)),
            pl.BlockSpec((None, tk, None, None, d_kv),
                         lambda h, qi, b, kv: (b, kv, 1, h, 0)),
            pl.BlockSpec((None, tk, None, None, d_kv),
                         lambda h, qi, b, kv: (b, kv, 2, h, 0)),
            pl.BlockSpec((None, tq, tk), lambda h, qi, b, kv: (h, qi, kv)),
        ],
        out_specs=pl.BlockSpec((None, tq, None, d_kv),
                               lambda h, qi, b, kv: (b, qi, h, 0)),
        scratch_shapes=[pltpu.VMEM((tq, 1), jnp.float32),       # running max
                        pltpu.VMEM((tq, 1), jnp.float32),       # running denom
                        pltpu.VMEM((tq, d_kv), jnp.float32)],   # accumulator
        compiler_params=pltpu.CompilerParams(
            dimension_semantics=("parallel", "parallel", "parallel",
                                 "arbitrary"),
            vmem_limit_bytes=budget),
    )(qkv5, qkv5, qkv5, bias_c)

    # Free-ish view back to (B, S, inner) for the wide output projection.
    ctx = ctx.reshape(B, S, inner)

    # ---- Kernel 3: output projection + residual ---------------------------
    out = pl.pallas_call(
        _out_proj_kernel,
        out_shape=jax.ShapeDtypeStruct((B, S, D), jnp.float32),
        grid=(B, nq, nc3),
        in_specs=[
            pl.BlockSpec((None, tq, inner), lambda b, qi, c: (b, qi, 0)),
            pl.BlockSpec((inner, tn3), lambda b, qi, c: (0, c)),
            pl.BlockSpec((None, tq, tn3), lambda b, qi, c: (b, qi, c)),
        ],
        out_specs=pl.BlockSpec((None, tq, tn3), lambda b, qi, c: (b, qi, c)),
        compiler_params=pltpu.CompilerParams(
            dimension_semantics=("parallel", "parallel", "parallel"),
            vmem_limit_bytes=budget),
    )(ctx, wo, hidden)

    # PyTorch returns (layer_output, position_bias) with bias shape (1,H,q,k).
    return out, bias_f32[None]


# ----------------------------------------------------------------------------
# Pure-JAX f32 reference (for a correctness check)
# ----------------------------------------------------------------------------
def reference_forward(hidden, params, bias, *, n_heads, d_kv, eps=1e-6):
    B, S, D = hidden.shape
    var = jnp.mean(hidden * hidden, axis=-1, keepdims=True)
    norm = params["ln_w"] * (hidden / jnp.sqrt(var + eps))
    q = norm @ params["wq"]
    k = norm @ params["wk"]
    v = norm @ params["wv"]

    def heads(x):
        return x.reshape(B, S, n_heads, d_kv).transpose(0, 2, 1, 3)

    qh, kh, vh = heads(q), heads(k), heads(v)
    scores = jnp.einsum("bhqd,bhkd->bhqk", qh, kh) + bias[None]
    w = jax.nn.softmax(scores, axis=-1)
    ctx = jnp.einsum("bhqk,bhkd->bhqd", w, vh)
    ctx = ctx.transpose(0, 2, 1, 3).reshape(B, S, n_heads * d_kv)
    return hidden + ctx @ params["wo"]


# ----------------------------------------------------------------------------
if __name__ == "__main__":
    B, S, D = 2, 256, 32
    n_heads, d_kv = 4, 8
    inner = n_heads * d_kv
    num_buckets = 32

    key = jax.random.PRNGKey(0)
    k0, k1, k2, k3, k4, k5, k6 = jax.random.split(key, 7)

    hidden = jax.random.normal(k0, (B, S, D), dtype=jnp.float32)
    params = {
        "ln_w": 0.5 + jax.random.uniform(k6, (D,), dtype=jnp.float32),
        "wq": jax.random.normal(k1, (D, inner), dtype=jnp.float32) * 0.05,
        "wk": jax.random.normal(k2, (D, inner), dtype=jnp.float32) * 0.05,
        "wv": jax.random.normal(k3, (D, inner), dtype=jnp.float32) * 0.05,
        "wo": jax.random.normal(k4, (inner, D), dtype=jnp.float32) * 0.05,
        "rel_bias": jax.random.normal(k5, (num_buckets, n_heads),
                                      dtype=jnp.float32) * 0.1,
    }

    # q_tile / kv_tile overrides exercise multi-tile query and the KV-tiled
    # online-softmax accumulation path (nq = 2, nk = 2 at S = 256).
    out, pos_bias = t5_layer_self_attention(
        hidden, params, n_heads=n_heads, d_kv=d_kv,
        eps=1e-6, num_buckets=num_buckets, is_decoder=False,
        use_bf16=True, q_tile=128, kv_tile=128)
    out = jax.block_until_ready(out)
    pos_bias = jax.block_until_ready(pos_bias)

    ref = reference_forward(hidden, params, pos_bias[0],
                            n_heads=n_heads, d_kv=d_kv, eps=1e-6)

    assert out.shape == (B, S, D)
    assert pos_bias.shape == (1, n_heads, S, S)
    # bf16 matmul operands with f32 accumulation -> loose-ish tolerance.
    assert jnp.allclose(out, ref, atol=2e-2, rtol=2e-2), (
        "max abs err = %f" % float(jnp.max(jnp.abs(out - ref))))

    print("KERNEL_OK")
</pallas_src>

<mosaic_0001>
module attributes {stable_mosaic.version = 11 : i64} {
  func.func @_norm_qkv_kernel(%arg0: i32, %arg1: i32, %arg2: i32, %arg3: memref<1x128x32xf32, #tpu.memory_space<vmem>>, %arg4: memref<1x32xf32, #tpu.memory_space<vmem>>, %arg5: memref<32x96xbf16, #tpu.memory_space<vmem>>, %arg6: memref<1x128x96xbf16, #tpu.memory_space<vmem>>) attributes {dimension_semantics = [#tpu.dimension_semantics<parallel>, #tpu.dimension_semantics<parallel>, #tpu.dimension_semantics<parallel>], iteration_bounds = array<i64: 2, 2, 1>, scalar_prefetch = 0 : i64, scratch_operands = 0 : i64, tpu.core_type = #tpu.core_type<tc>, window_params = [{transform_indices = @transform_0, window_bounds = array<i64: 1, 128, 32>}, {pipeline_mode = #tpu.pipeline_mode<synchronous>, transform_indices = @transform_1, window_bounds = array<i64: 1, 32>}, {transform_indices = @transform_2, window_bounds = array<i64: 32, 96>}, {transform_indices = @transform_3, window_bounds = array<i64: 1, 128, 96>}]} {
    %c0 = arith.constant 0 : index
    %c0_0 = arith.constant 0 : index
    %c0_1 = arith.constant 0 : index
    %0 = vector.load %arg3[%c0, %c0_0, %c0_1] : memref<1x128x32xf32, #tpu.memory_space<vmem>>, vector<1x128x32xf32>
    %1 = vector.shape_cast %0 : vector<1x128x32xf32> to vector<128x32xf32>
    %2 = arith.mulf %1, %1 : vector<128x32xf32>
    %cst = arith.constant dense<0.000000e+00> : vector<128xf32>
    %3 = vector.multi_reduction <add>, %2, %cst [1] : vector<128x32xf32> to vector<128xf32>
    %4 = vector.shape_cast %3 : vector<128xf32> to vector<128x1xf32>
    %cst_2 = arith.constant 3.200000e+01 : f32
    %5 = vector.broadcast %cst_2 : f32 to vector<128x1xf32>
    %6 = arith.divf %4, %5 : vector<128x1xf32>
    %cst_3 = arith.constant 9.99999997E-7 : f32
    %7 = vector.broadcast %cst_3 : f32 to vector<128x1xf32>
    %8 = arith.addf %6, %7 : vector<128x1xf32>
    %9 = math.rsqrt %8 : vector<128x1xf32>
    %10 = vector.broadcast %9 : vector<128x1xf32> to vector<128x32xf32>
    %11 = arith.mulf %1, %10 : vector<128x32xf32>
    %c0_4 = arith.constant 0 : index
    %c0_5 = arith.constant 0 : index
    %12 = vector.load %arg4[%c0_4, %c0_5] : memref<1x32xf32, #tpu.memory_space<vmem>>, vector<1x32xf32>
    %13 = vector.shape_cast %12 : vector<1x32xf32> to vector<32xf32>
    %14 = vector.shape_cast %13 : vector<32xf32> to vector<1x32xf32>
    %15 = vector.broadcast %14 : vector<1x32xf32> to vector<128x32xf32>
    %16 = arith.mulf %11, %15 : vector<128x32xf32>
    %17 = arith.truncf %16 : vector<128x32xf32> to vector<128x32xbf16>
    %c0_6 = arith.constant 0 : index
    %c0_7 = arith.constant 0 : index
    %18 = vector.load %arg5[%c0_6, %c0_7] : memref<32x96xbf16, #tpu.memory_space<vmem>>, vector<32x96xbf16>
    %cst_8 = arith.constant dense<0.000000e+00> : vector<128x96xf32>
    %19 = tpu.matmul %17, %18, %cst_8 {dimension_numbers = #tpu.dot_dimension_numbers<[1], [0], [0], [1], [0, 0, 1, 1], [], []>} : vector<128x32xbf16>, vector<32x96xbf16>, vector<128x96xf32> -> vector<128x96xf32>
    %20 = arith.truncf %19 : vector<128x96xf32> to vector<128x96xbf16>
    %c0_9 = arith.constant 0 : index
    %c0_10 = arith.constant 0 : index
    %c0_11 = arith.constant 0 : index
    %21 = vector.load %arg6[%c0_9, %c0_10, %c0_11] : memref<1x128x96xbf16, #tpu.memory_space<vmem>>, vector<1x128x96xbf16>
    %22 = vector.shape_cast %21 : vector<1x128x96xbf16> to vector<128x96xbf16>
    %23 = vector.shape_cast %20 : vector<128x96xbf16> to vector<1x128x96xbf16>
    tpu.vector_store %arg6[%c0_9, %c0_10, %c0_11], %23 {strides = array<i32>} : memref<1x128x96xbf16, #tpu.memory_space<vmem>>, vector<1x128x96xbf16>,
    return
  }
  func.func @transform_0(%arg0: i32, %arg1: i32, %arg2: i32) -> (i32, i32, i32) {
    %c0_i32 = arith.constant 0 : i32
    %c0_i32_0 = arith.constant 0 : i32
    return %arg0, %arg1, %c0_i32 : i32, i32, i32
  }
  func.func @transform_1(%arg0: i32, %arg1: i32, %arg2: i32) -> (i32, i32) {
    %c0_i32 = arith.constant 0 : i32
    %c0_i32_0 = arith.constant 0 : i32
    %c0_i32_1 = arith.constant 0 : i32
    return %c0_i32, %c0_i32_0 : i32, i32
  }
  func.func @transform_2(%arg0: i32, %arg1: i32, %arg2: i32) -> (i32, i32) {
    %c0_i32 = arith.constant 0 : i32
    %c0_i32_0 = arith.constant 0 : i32
    return %c0_i32, %arg2 : i32, i32
  }
  func.func @transform_3(%arg0: i32, %arg1: i32, %arg2: i32) -> (i32, i32, i32) {
    %c0_i32 = arith.constant 0 : i32
    return %arg0, %arg1, %arg2 : i32, i32, i32
  }
}

</mosaic_0001>

<llo_original>
// kernel: tpu_custom_call.1
$region0: #{tpu_custom_call.1}
  #allocation0 [shape = 'u32[]', space=smem, size = 0x4, offset = 0x4, fixed_abs, tag = 'smem constant byte address 0x4 - core index']
  #allocation1 [shape = 'u32[144,128]{1,0:T(1,128)}', space=vmem, size = 0x12000, scoped, tag = 'internal scratch']
  %s0 = inlined_call_operand.vmem [shape: f32[2,256,32], index: 0, kind: input, shape index: {}]
  %s1 = inlined_call_operand.vmem [shape: f32[1,32], index: 1, kind: input, shape index: {}]
  %s2 = inlined_call_operand.vmem [shape: bf16[32,96], index: 2, kind: input, shape index: {}]
  %s3 = inlined_call_operand.vmem [shape: bf16[2,256,96], index: 3, kind: output, shape index: {}]
  %s4 = sld [smem:[#allocation0]]
  $region45: #{tpu_custom_call.1} parent=0
    _
  %s6 = ssub.s32 1, %s4
  %s7 = scalar_select 0, %s6, %s4
  loop: start=0, step=1, limit=6
  $region2: #{tpu_custom_call.1} parent=0 // loop_pre_header
    _
  $region3: #{tpu_custom_call.1} parent=0 // loop_header
    %s9 = sphi 0, %s13
    %p10 = scmp.ge.s32.totalorder %s9, 6
    %s16 = sphi 0, %s35
    %s17 = sphi 0, %s31
    %s18 = sphi 0, %s27
    %s19 = sphi 0, %s16
    %s20 = sphi 0, %s17
    %s21 = sphi 0, %s18
    %s22 = sphi 0, %s19
    %s23 = sphi 0, %s20
    %s24 = sphi 0, %s21
    %s40 = sphi 0, %s42
    %s43 = sphi 0, %s40
    %s44 = sphi 0, %s43
    %s60 = sphi 0, %s44
    %s64 = sphi 0, %s64
    %s66 = sphi 0, %s64
    %s67 = sphi 0, %s66
    %s81 = sphi 0, %s67
    %s87 = sphi 0, %s89
    %s90 = sphi 0, %s87
    %s91 = sphi 0, %s90
    %s107 = sphi 0, %s91
    %s117 = sphi 0, %s119
    %s120 = sphi 0, %s117
    %s121 = sphi 0, %s120
    %s137 = sphi 0, %s121
  $region4: #{tpu_custom_call.1} parent=0 // loop_header_branch
    %12 = sbr.rel (%p10) target = $region8
  $region5: #{tpu_custom_call.1} parent=0 // loop_body
    %s14 = ssub.s32 %s9, 1
    %s15 = ssub.s32 %s9, 2
    %s25 = sadd.s32 1, %s18
    %p26 = scmp.ge.s32.totalorder %s25, 1
    %s27 = scalar_select %p26, 0, %s25
    %s28 = sadd.s32 1, %s17
    %s29 = scalar_select %p26, %s28, %s17
    %p30 = scmp.ge.s32.totalorder %s29, 2
    %s31 = scalar_select %p30, 0, %s29
    %s32 = sadd.s32 1, %s16
    %s33 = scalar_select %p30, %s32, %s16
    %p34 = scmp.ge.s32.totalorder %s33, 2
    %s35 = scalar_select %p34, 0, %s33
    %s36 = ssub.s32 %s16, %s35
    %s37 = ssub.s32 %s17, %s31
    %s38 = sor.u32 %s36, %s37
    %p39 = scmp.eq.s32.totalorder %s38, 0
    %s41 = sadd.s32 %s40, 1
    %s42 = scalar_select %p39, %s40, %s41
    %p45 = pneg %p39
    %p46 = scmp.eq.s32.totalorder %s9, 3
    %p47 = por %p45, %p46
    %p48 = scmp.ne.s32.totalorder %s40, %s43
    %p49 = scmp.eq.s32.totalorder %s9, 0
    %p50 = por %p48, %p49
    %p51 = scmp.ne.s32.totalorder %s40, %s43
    %p52 = scmp.eq.s32.totalorder %s14, 3
    %p53 = por %p51, %p52
    %p54 = scmp.ne.s32.totalorder %s43, %s44
    %p55 = scmp.eq.s32.totalorder %s14, 0
    %p56 = por %p54, %p55
    %p57 = scmp.ne.s32.totalorder %s43, %s44
    %p58 = scmp.eq.s32.totalorder %s15, 3
    %p59 = por %p57, %p58
    %p61 = scmp.ne.s32.totalorder %s44, %s60
    %p62 = scmp.eq.s32.totalorder %s15, 0
    %p63 = por %p61, %p62
    %s65 = sadd.s32 %s64, 1
    %p68 = scmp.eq.s32.totalorder %s9, 3
    %p69 = scmp.ne.s32.totalorder %s64, %s66
    %p70 = scmp.eq.s32.totalorder %s9, 0
    %p71 = por %p69, %p70
    %p72 = scmp.ne.s32.totalorder %s64, %s66
    %p73 = scmp.eq.s32.totalorder %s14, 3
    %p74 = por %p72, %p73
    %p75 = scmp.ne.s32.totalorder %s66, %s67
    %p76 = scmp.eq.s32.totalorder %s14, 0
    %p77 = por %p75, %p76
    %p78 = scmp.ne.s32.totalorder %s66, %s67
    %p79 = scmp.eq.s32.totalorder %s15, 3
    %p80 = por %p78, %p79
    %p82 = scmp.ne.s32.totalorder %s67, %s81
    %p83 = scmp.eq.s32.totalorder %s15, 0
    %p84 = por %p82, %p83
    %s85 = ssub.s32 %s18, %s27
    %p86 = scmp.eq.s32.totalorder %s85, 0
    %s88 = sadd.s32 %s87, 1
    %s89 = scalar_select %p86, %s87, %s88
    %p92 = pneg %p86
    %p93 = scmp.eq.s32.totalorder %s9, 3
    %p94 = por %p92, %p93
    %p95 = scmp.ne.s32.totalorder %s87, %s90
    %p96 = scmp.eq.s32.totalorder %s9, 0
    %p97 = por %p95, %p96
    %p98 = scmp.ne.s32.totalorder %s87, %s90
    %p99 = scmp.eq.s32.totalorder %s14, 3
    %p100 = por %p98, %p99
    %p101 = scmp.ne.s32.totalorder %s90, %s91
    %p102 = scmp.eq.s32.totalorder %s14, 0
    %p103 = por %p101, %p102
    %p104 = scmp.ne.s32.totalorder %s90, %s91
    %p105 = scmp.eq.s32.totalorder %s15, 3
    %p106 = por %p104, %p105
    %p108 = scmp.ne.s32.totalorder %s91, %s107
    %p109 = scmp.eq.s32.totalorder %s15, 0
    %p110 = por %p108, %p109
    %s111 = ssub.s32 %s16, %s35
    %s112 = ssub.s32 %s17, %s31
    %s113 = sor.u32 %s111, %s112
    %s114 = ssub.s32 %s18, %s27
    %s115 = sor.u32 %s113, %s114
    %p116 = scmp.eq.s32.totalorder %s115, 0
    %s118 = sadd.s32 %s117, 1
    %s119 = scalar_select %p116, %s117, %s118
    %p122 = pneg %p116
    %p123 = scmp.eq.s32.totalorder %s9, 3
    %p124 = por %p122, %p123
    %p125 = scmp.ne.s32.totalorder %s117, %s120
    %p126 = scmp.eq.s32.totalorder %s9, 0
    %p127 = por %p125, %p126
    %p128 = scmp.ne.s32.totalorder %s117, %s120
    %p129 = scmp.eq.s32.totalorder %s14, 3
    %p130 = por %p128, %p129
    %p131 = scmp.ne.s32.totalorder %s120, %s121
    %p132 = scmp.eq.s32.totalorder %s14, 0
    %p133 = por %p131, %p132
    %p134 = scmp.ne.s32.totalorder %s120, %s121
    %p135 = scmp.eq.s32.totalorder %s15, 3
    %p136 = por %p134, %p135
    %p138 = scmp.ne.s32.totalorder %s121, %s137
    %p139 = scmp.eq.s32.totalorder %s15, 0
    %p140 = por %p138, %p139
    %p141 = scmp.le.s32.totalorder 1, %s9
    %p142 = scmp.lt.s32.totalorder %s9, 5
    %p143 = pnand %p141, %p142
    %p144 = pneg %p143
    // Predicated region
    $region9: #{tpu_custom_call.1} parent=5 // pred_check
      _
    $region10: #{tpu_custom_call.1} parent=5 // pred_check_branch
      %146 = sbr.rel (%p143) target = $region12
    $region11: #{tpu_custom_call.1} parent=5 // pred_region
      %s147 = ssub.s32 %s9, 1
      // Predicated region
      $region13: #{tpu_custom_call.1} parent=11 // pred_check
        %p148 = pneg %p77
      $region14: #{tpu_custom_call.1} parent=11 // pred_check_branch
        %150 = sbr.rel (%p148) target = $region16
      $region15: #{tpu_custom_call.1} parent=11 // pred_region
        _
      $region16: #{tpu_custom_call.1} parent=11 // pred_fallthru
        _
      // Predicated region
      $region17: #{tpu_custom_call.1} parent=11 // pred_check
        %p151 = pneg %p103
      $region18: #{tpu_custom_call.1} parent=11 // pred_check_branch
        %153 = sbr.rel (%p151) target = $region20
      $region19: #{tpu_custom_call.1} parent=11 // pred_region
        %p154 = scmp.lt.s32.totalorder %s21, 0
        %s155 = scalar_select %p154, %s21, 0
        %s156 = smul.addr %s155, 4
        %s157 = scalar_lea.vmem %s2, %s156
      $region20: #{tpu_custom_call.1} parent=11 // pred_fallthru
        _
    $region12: #{tpu_custom_call.1} parent=5 // pred_fallthru
      _
    %p158 = scmp.lt.s32.totalorder %s9, 4
    // Predicated region
    $region21: #{tpu_custom_call.1} parent=5 // pred_check
      %p159 = pneg %p158
    $region22: #{tpu_custom_call.1} parent=5 // pred_check_branch
      %161 = sbr.rel (%p159) target = $region24
    $region23: #{tpu_custom_call.1} parent=5 // pred_region
      // Predicated region
      $region25: #{tpu_custom_call.1} parent=23 // pred_check
        %p162 = pneg %p50
      $region26: #{tpu_custom_call.1} parent=23 // pred_check_branch
        %164 = sbr.rel (%p162) target = $region28
      $region27: #{tpu_custom_call.1} parent=23 // pred_region
        %s165 = smul.u32 16, %s17
        %p166 = scmp.lt.s32.totalorder %s16, 1
        %s167 = scalar_select %p166, %s16, 1
        %p168 = scmp.lt.s32.totalorder %s165, 31
        %s169 = scalar_select %p168, %s165, 31
        %s170 = smul.addr %s167, 32
        %s171 = sadd.s32 %s169, %s170
        %s172 = smul.addr %s171, 8
        %s173 = scalar_lea.vmem %s0, %s172
        %s174 = smul.u32 16, %s17
      $region28: #{tpu_custom_call.1} parent=23 // pred_fallthru
        _
    $region24: #{tpu_custom_call.1} parent=5 // pred_fallthru
      _
    %p175 = scmp.le.s32.totalorder 1, %s9
    %p176 = scmp.lt.s32.totalorder %s9, 5
    %p177 = pnand %p175, %p176
    %p178 = pneg %p177
    // Predicated region
    $region29: #{tpu_custom_call.1} parent=5 // pred_check
      _
    $region30: #{tpu_custom_call.1} parent=5 // pred_check_branch
      %180 = sbr.rel (%p177) target = $region32
    $region31: #{tpu_custom_call.1} parent=5 // pred_region
      %s181 = ssub.s32 %s9, 1
      %s182 = smul.u32 16, %s20
      %p183 = scmp.lt.s32.totalorder %s19, 1
      %s184 = scalar_select %p183, %s19, 1
      %p185 = scmp.lt.s32.totalorder %s182, 31
      %s186 = scalar_select %p185, %s182, 31
      %s187 = smul.addr %s184, 32
      %s188 = sadd.s32 %s186, %s187
      %s189 = smul.addr %s188, 8
      %s190 = scalar_lea.vmem %s0, %s189
      %p191 = pneg %p56
      %p192 = pneg %p53
      %p193 = pneg %p77
      %p194 = pneg %p74
      %p195 = scmp.lt.s32.totalorder %s21, 0
      %s196 = scalar_select %p195, %s21, 0
      %s197 = smul.addr %s196, 4
      %s198 = scalar_lea.vmem %s2, %s197
      %p199 = pneg %p103
      %p200 = pneg %p100
      %p201 = pneg %p133
      %p202 = pneg %p130
      %s203 = smul.u32 16, %s20
      %p204 = scmp.lt.s32.totalorder %s19, 1
      %s205 = scalar_select %p204, %s19, 1
      %p206 = scmp.lt.s32.totalorder %s203, 31
      %s207 = scalar_select %p206, %s203, 31
      %p208 = scmp.lt.s32.totalorder %s21, 0
      %s209 = scalar_select %p208, %s21, 0
      %s210 = sadd.s32 %s209, %s207
      %s211 = smul.addr %s205, 32
      %s212 = sadd.s32 %s210, %s211
      %s213 = smul.addr %s212, 4
      %s214 = scalar_lea.vmem %s3, %s213
      %s215 = smul.u32 16, %s20
      %p216 = scmp.lt.s32.totalorder %s19, 1
      %s217 = scalar_select %p216, %s19, 1
      %p218 = scmp.lt.s32.totalorder %s215, 31
      %s219 = scalar_select %p218, %s215, 31
      %s220 = smul.addr %s217, 32
      %s221 = sadd.s32 %s219, %s220
      %s222 = smul.addr %s221, 8
      %s223 = scalar_lea.vmem %s0, %s222
      %s224 = smul.u32 16, %s20
      %p225 = scmp.lt.s32.totalorder %s21, 0
      %s226 = scalar_select %p225, %s21, 0
      %s227 = smul.addr %s226, 4
      %s228 = scalar_lea.vmem %s2, %s227
      %s229 = smul.u32 16, %s20
      %p230 = scmp.lt.s32.totalorder %s19, 1
      %s231 = scalar_select %p230, %s19, 1
      %p232 = scmp.lt.s32.totalorder %s229, 31
      %s233 = scalar_select %p232, %s229, 31
      %p234 = scmp.lt.s32.totalorder %s21, 0
      %s235 = scalar_select %p234, %s21, 0
      %s236 = sadd.s32 %s235, %s233
      %s237 = smul.addr %s231, 32
      %s238 = sadd.s32 %s236, %s237
      %s239 = smul.addr %s238, 4
      %s240 = scalar_lea.vmem %s3, %s239
      %s241 = smul.u32 16, %s20
      %v243 = vld [vmem:[%s223] sm:$0xff]
      %v244 = vld [vmem:[%s223 + $0x8] sm:$0xff]
      %v245 = vld [vmem:[%s223 + $0x10] sm:$0xff]
      %v246 = vld [vmem:[%s223 + $0x18] sm:$0xff]
      %v247 = vld [vmem:[%s223 + $0x20] sm:$0xff]
      %v248 = vld [vmem:[%s223 + $0x28] sm:$0xff]
      %v249 = vld [vmem:[%s223 + $0x30] sm:$0xff]
      %v250 = vld [vmem:[%s223 + $0x38] sm:$0xff]
      %v251 = vld [vmem:[%s223 + $0x40] sm:$0xff]
      %v252 = vld [vmem:[%s223 + $0x48] sm:$0xff]
      %v253 = vld [vmem:[%s223 + $0x50] sm:$0xff]
      %v254 = vld [vmem:[%s223 + $0x58] sm:$0xff]
      %v255 = vld [vmem:[%s223 + $0x60] sm:$0xff]
      %v256 = vld [vmem:[%s223 + $0x68] sm:$0xff]
      %v257 = vld [vmem:[%s223 + $0x70] sm:$0xff]
      %v258 = vld [vmem:[%s223 + $0x78] sm:$0xff]
      %v259 = vmul.f32 %v243, %v243
      %v260 = vmul.f32 %v244, %v244
      %v261 = vmul.f32 %v245, %v245
      %v262 = vmul.f32 %v246, %v246
      %v263 = vmul.f32 %v247, %v247
      %v264 = vmul.f32 %v248, %v248
      %v265 = vmul.f32 %v249, %v249
      %v266 = vmul.f32 %v250, %v250
      %v267 = vmul.f32 %v251, %v251
      %v268 = vmul.f32 %v252, %v252
      %v269 = vmul.f32 %v253, %v253
      %v270 = vmul.f32 %v254, %v254
      %v271 = vmul.f32 %v255, %v255
      %v272 = vmul.f32 %v256, %v256
      %v273 = vmul.f32 %v257, %v257
      %v274 = vmul.f32 %v258, %v258
      %vm275 = vcmask 261120
      %v276 = vsel %vm275, %v259, 0.0
      %277 = vadd.xlane.f32.xlu0 %v276
      %v278 = vpop.xlane.xlu0 %277
      %v279 = vsel %vm275, %v260, 0.0
      %280 = vadd.xlane.f32.xlu0 %v279
      %v281 = vpop.xlane.xlu0 %280
      %v282 = vsel %vm275, %v261, 0.0
      %283 = vadd.xlane.f32.xlu0 %v282
      %v284 = vpop.xlane.xlu0 %283
      %v285 = vsel %vm275, %v262, 0.0
      %286 = vadd.xlane.f32.xlu0 %v285
      %v287 = vpop.xlane.xlu0 %286
      %v288 = vsel %vm275, %v263, 0.0
      %289 = vadd.xlane.f32.xlu0 %v288
      %v290 = vpop.xlane.xlu0 %289
      %v291 = vsel %vm275, %v264, 0.0
      %292 = vadd.xlane.f32.xlu0 %v291
      %v293 = vpop.xlane.xlu0 %292
      %v294 = vsel %vm275, %v265, 0.0
      %295 = vadd.xlane.f32.xlu0 %v294
      %v296 = vpop.xlane.xlu0 %295
      %v297 = vsel %vm275, %v266, 0.0
      %298 = vadd.xlane.f32.xlu0 %v297
      %v299 = vpop.xlane.xlu0 %298
      %v300 = vsel %vm275, %v267, 0.0
      %301 = vadd.xlane.f32.xlu0 %v300
      %v302 = vpop.xlane.xlu0 %301
      %v303 = vsel %vm275, %v268, 0.0
      %304 = vadd.xlane.f32.xlu0 %v303
      %v305 = vpop.xlane.xlu0 %304
      %v306 = vsel %vm275, %v269, 0.0
      %307 = vadd.xlane.f32.xlu0 %v306
      %v308 = vpop.xlane.xlu0 %307
      %v309 = vsel %vm275, %v270, 0.0
      %310 = vadd.xlane.f32.xlu0 %v309
      %v311 = vpop.xlane.xlu0 %310
      %v312 = vsel %vm275, %v271, 0.0
      %313 = vadd.xlane.f32.xlu0 %v312
      %v314 = vpop.xlane.xlu0 %313
      %v315 = vsel %vm275, %v272, 0.0
      %316 = vadd.xlane.f32.xlu0 %v315
      %v317 = vpop.xlane.xlu0 %316
      %v318 = vsel %vm275, %v273, 0.0
      %319 = vadd.xlane.f32.xlu0 %v318
      %v320 = vpop.xlane.xlu0 %319
      %v321 = vsel %vm275, %v274, 0.0
      %322 = vadd.xlane.f32.xlu0 %v321
      %v323 = vpop.xlane.xlu0 %322
      %v324 = vrcp.pop 32.0
      %v325 = vmul.f32 %v278, %v324
      %v326 = vmul.f32 %v281, %v324
      %v327 = vmul.f32 %v284, %v324
      %v328 = vmul.f32 %v287, %v324
      %v329 = vmul.f32 %v290, %v324
      %v330 = vmul.f32 %v293, %v324
      %v331 = vmul.f32 %v296, %v324
      %v332 = vmul.f32 %v299, %v324
      %v333 = vmul.f32 %v302, %v324
      %v334 = vmul.f32 %v305, %v324
      %v335 = vmul.f32 %v308, %v324
      %v336 = vmul.f32 %v311, %v324
      %v337 = vmul.f32 %v314, %v324
      %v338 = vmul.f32 %v317, %v324
      %v339 = vmul.f32 %v320, %v324
      %v340 = vmul.f32 %v323, %v324
      %v341 = vadd.f32 %v325, 1e-06
      %v342 = vadd.f32 %v326, 1e-06
      %v343 = vadd.f32 %v327, 1e-06
      %v344 = vadd.f32 %v328, 1e-06
      %v345 = vadd.f32 %v329, 1e-06
      %v346 = vadd.f32 %v330, 1e-06
      %v347 = vadd.f32 %v331, 1e-06
      %v348 = vadd.f32 %v332, 1e-06
      %v349 = vadd.f32 %v333, 1e-06
      %v350 = vadd.f32 %v334, 1e-06
      %v351 = vadd.f32 %v335, 1e-06
      %v352 = vadd.f32 %v336, 1e-06
      %v353 = vadd.f32 %v337, 1e-06
      %v354 = vadd.f32 %v338, 1e-06
      %v355 = vadd.f32 %v339, 1e-06
      %v356 = vadd.f32 %v340, 1e-06
      %v357 = vrsqrt.pop %v341
      %v358 = vrsqrt.pop %v342
      %v359 = vrsqrt.pop %v343
      %v360 = vrsqrt.pop %v344
      %v361 = vrsqrt.pop %v345
      %v362 = vrsqrt.pop %v346
      %v363 = vrsqrt.pop %v347
      %v364 = vrsqrt.pop %v348
      %v365 = vrsqrt.pop %v349
      %v366 = vrsqrt.pop %v350
      %v367 = vrsqrt.pop %v351
      %v368 = vrsqrt.pop %v352
      %v369 = vrsqrt.pop %v353
      %v370 = vrsqrt.pop %v354
      %v371 = vrsqrt.pop %v355
      %v372 = vrsqrt.pop %v356
      %v373 = vmul.f32 %v243, %v357
      %v374 = vmul.f32 %v244, %v358
      %v375 = vmul.f32 %v245, %v359
      %v376 = vmul.f32 %v246, %v360
      %v377 = vmul.f32 %v247, %v361
      %v378 = vmul.f32 %v248, %v362
      %v379 = vmul.f32 %v249, %v363
      %v380 = vmul.f32 %v250, %v364
      %v381 = vmul.f32 %v251, %v365
      %v382 = vmul.f32 %v252, %v366
      %v383 = vmul.f32 %v253, %v367
      %v384 = vmul.f32 %v254, %v368
      %v385 = vmul.f32 %v255, %v369
      %v386 = vmul.f32 %v256, %v370
      %v387 = vmul.f32 %v257, %v371
      %v388 = vmul.f32 %v258, %v372
      %v389 = vld [vmem:[%s1] sm:$0x1]
      %v391 = vlaneseq
      %v392 = vshrl.u32 %v391, 7
      %v393 = vsub.s32 0, %v392
      %v394 = vrot.slane %v389, %v393
      %v396 = vmul.f32 %v373, %v394
      %v397 = vmul.f32 %v374, %v394
      %v398 = vmul.f32 %v375, %v394
      %v399 = vmul.f32 %v376, %v394
      %v400 = vmul.f32 %v377, %v394
      %v401 = vmul.f32 %v378, %v394
      %v402 = vmul.f32 %v379, %v394
      %v403 = vmul.f32 %v380, %v394
      %v404 = vmul.f32 %v381, %v394
      %v405 = vmul.f32 %v382, %v394
      %v406 = vmul.f32 %v383, %v394
      %v407 = vmul.f32 %v384, %v394
      %v408 = vmul.f32 %v385, %v394
      %v409 = vmul.f32 %v386, %v394
      %v410 = vmul.f32 %v387, %v394
      %v411 = vmul.f32 %v388, %v394
      %v412 = vpack.c.bf16 %v397, %v396
      %v413 = vpack.c.bf16 %v399, %v398
      %v414 = vpack.c.bf16 %v401, %v400
      %v415 = vpack.c.bf16 %v403, %v402
      %v416 = vpack.c.bf16 %v405, %v404
      %v417 = vpack.c.bf16 %v407, %v406
      %v418 = vpack.c.bf16 %v409, %v408
      %v419 = vpack.c.bf16 %v411, %v410
      %v420 = vld [vmem:[%s228] sm:$0xf]
      %v421 = vld [vmem:[%s228 + $0x4] sm:$0xf]
      %v422 = vld [vmem:[%s228 + $0x8] sm:$0xf]
      %v423 = vld [vmem:[%s228 + $0xc] sm:$0xf]
      %v428 = vunpack.c.l.b16 %v420
      %v429 = vunpack.c.l.b16 %v421
      %v430 = vunpack.c.l.b16 %v422
      %v431 = vunpack.c.l.b16 %v423
      %v432 = vpack.c.b16 %v429, %v428
      %v433 = vpack.c.b16 %v431, %v430
      %v437 = vsel %vm275, %v412, 0
      %v440 = vsel %vm275, %v413, 0
      %v443 = vsel %vm275, %v414, 0
      %v446 = vsel %vm275, %v415, 0
      %v449 = vsel %vm275, %v416, 0
      %v452 = vsel %vm275, %v417, 0
      %v455 = vsel %vm275, %v418, 0
      %v458 = vsel %vm275, %v419, 0
      %460 = vmatprep.subr.bf16.mxu0 0
      %461 = vmatpush1.bf16.msra.mxu0 %v432
      %462 = vmatprep.subr.bf16.mxu0 0
      %463 = vmatpush1.bf16.msra.mxu0 %v433
      %464 = vmatprep.subr.bf16.mxu0 0
      %465 = vmatpush1.bf16.msra.mxu0 0
      %466 = vmatprep.subr.bf16.mxu0 0
      %467 = vmatpush1.bf16.msra.mxu0 0
      %468 = vmatprep.subr.bf16.mxu0 0
      %469 = vmatpush1.bf16.msra.mxu0 0
      %470 = vmatprep.subr.bf16.mxu0 0
      %471 = vmatpush1.bf16.msra.mxu0 0
      %472 = vmatprep.subr.bf16.mxu0 0
      %473 = vmatpush1.bf16.msra.mxu0 0
      %474 = vmatprep.subr.bf16.mxu0 0
      %475 = vmatpush1.bf16.msra.mxu0 0
      %476 = vmatprep.subr.bf16.mxu0 0
      %477 = vmatpush1.bf16.msra.mxu0 0
      %478 = vmatprep.subr.bf16.mxu0 0
      %479 = vmatpush1.bf16.msra.mxu0 0
      %480 = vmatprep.subr.bf16.mxu0 0
      %481 = vmatpush1.bf16.msra.mxu0 0
      %482 = vmatprep.subr.bf16.mxu0 0
      %483 = vmatpush1.bf16.msra.mxu0 0
      %484 = vmatprep.subr.bf16.mxu0 0
      %485 = vmatpush1.bf16.msra.mxu0 0
      %486 = vmatprep.subr.bf16.mxu0 0
      %487 = vmatpush1.bf16.msra.mxu0 0
      %488 = vmatprep.subr.bf16.mxu0 0
      %489 = vmatpush1.bf16.msra.mxu0 0
      %490 = vmatprep.subr.bf16.mxu0 0
      %491 = vmatpush1.bf16.msra.mxu0 0
      %492 = vmatprep.mubr.bf16.mxu0 0
      %493 = vmatmul.mubr.bf16.gmra.mrb[0].mxu0 %v437
      %v494 = vpop.f32.mrb[0].mxu0
      %v495 = vadd.f32 0.0, %v494
      %v496 = vpop.f32.mrb[0].mxu0
      %v497 = vpop.f32.mrb[0].mxu0
      %v498 = vadd.f32 0.0, %v497
      %v499 = vpop.f32.mrb[0].mxu0
      %500 = vmatprep.mubr.bf16.mxu0 0
      %501 = vmatmul.mubr.bf16.gmra.mrb[0].mxu0 %v440
      %v502 = vpop.f32.mrb[0].mxu0
      %v503 = vadd.f32 0.0, %v502
      %v504 = vpop.f32.mrb[0].mxu0
      %v505 = vpop.f32.mrb[0].mxu0
      %v506 = vadd.f32 0.0, %v505
      %v507 = vpop.f32.mrb[0].mxu0
      %508 = vmatprep.mubr.bf16.mxu0 0
      %509 = vmatmul.mubr.bf16.gmra.mrb[0].mxu0 %v443
      %v510 = vpop.f32.mrb[0].mxu0
      %v511 = vadd.f32 0.0, %v510
      %v512 = vpop.f32.mrb[0].mxu0
      %v513 = vpop.f32.mrb[0].mxu0
      %v514 = vadd.f32 0.0, %v513
      %v515 = vpop.f32.mrb[0].mxu0
      %516 = vmatprep.mubr.bf16.mxu0 0
      %517 = vmatmul.mubr.bf16.gmra.mrb[0].mxu0 %v446
      %v518 = vpop.f32.mrb[0].mxu0
      %v519 = vadd.f32 0.0, %v518
      %v520 = vpop.f32.mrb[0].mxu0
      %v521 = vpop.f32.mrb[0].mxu0
      %v522 = vadd.f32 0.0, %v521
      %v523 = vpop.f32.mrb[0].mxu0
      %524 = vmatprep.mubr.bf16.mxu0 0
      %525 = vmatmul.mubr.bf16.gmra.mrb[0].mxu0 %v449
      %v526 = vpop.f32.mrb[0].mxu0
      %v527 = vadd.f32 0.0, %v526
      %v528 = vpop.f32.mrb[0].mxu0
      %v529 = vpop.f32.mrb[0].mxu0
      %v530 = vadd.f32 0.0, %v529
      %v531 = vpop.f32.mrb[0].mxu0
      %532 = vmatprep.mubr.bf16.mxu0 0
      %533 = vmatmul.mubr.bf16.gmra.mrb[0].mxu0 %v452
      %v534 = vpop.f32.mrb[0].mxu0
      %v535 = vadd.f32 0.0, %v534
      %v536 = vpop.f32.mrb[0].mxu0
      %v537 = vpop.f32.mrb[0].mxu0
      %v538 = vadd.f32 0.0, %v537
      %v539 = vpop.f32.mrb[0].mxu0
      %540 = vmatprep.mubr.bf16.mxu0 0
      %541 = vmatmul.mubr.bf16.gmra.mrb[0].mxu0 %v455
      %v542 = vpop.f32.mrb[0].mxu0
      %v543 = vadd.f32 0.0, %v542
      %v544 = vpop.f32.mrb[0].mxu0
      %v545 = vpop.f32.mrb[0].mxu0
      %v546 = vadd.f32 0.0, %v545
      %v547 = vpop.f32.mrb[0].mxu0
      %548 = vmatprep.mubr.bf16.mxu0 0
      %549 = vmatmul.mubr.bf16.gmra.mrb[0].mxu0 %v458
      %v550 = vpop.f32.mrb[0].mxu0
      %v551 = vadd.f32 0.0, %v550
      %v552 = vpop.f32.mrb[0].mxu0
      %v553 = vpop.f32.mrb[0].mxu0
      %v554 = vadd.f32 0.0, %v553
      %v555 = vpop.f32.mrb[0].mxu0
      %556 = vdwg.mxu0
      %v557 = vpack.c.bf16 %v498, %v495
      %v558 = vpack.c.bf16 %v506, %v503
      %v559 = vpack.c.bf16 %v514, %v511
      %v560 = vpack.c.bf16 %v522, %v519
      %v561 = vpack.c.bf16 %v530, %v527
      %v562 = vpack.c.bf16 %v538, %v535
      %v563 = vpack.c.bf16 %v546, %v543
      %v564 = vpack.c.bf16 %v554, %v551
      %v573 = vunpack.c.l.b16 %v557
      %v574 = vunpack.c.h.b16 %v557
      %v575 = vunpack.c.l.b16 %v558
      %v576 = vunpack.c.h.b16 %v558
      %v577 = vunpack.c.l.b16 %v559
      %v578 = vunpack.c.h.b16 %v559
      %v579 = vunpack.c.l.b16 %v560
      %v580 = vunpack.c.h.b16 %v560
      %v581 = vunpack.c.l.b16 %v561
      %v582 = vunpack.c.h.b16 %v561
      %v583 = vunpack.c.l.b16 %v562
      %v584 = vunpack.c.h.b16 %v562
      %v585 = vunpack.c.l.b16 %v563
      %v586 = vunpack.c.h.b16 %v563
      %v587 = vunpack.c.l.b16 %v564
      %v588 = vunpack.c.h.b16 %v564
      %v589 = vpack.c.b16 %v573, %v573
      %v590 = vpack.c.b16 %v574, %v574
      %v591 = vpack.c.b16 %v575, %v575
      %v592 = vpack.c.b16 %v576, %v576
      %v593 = vpack.c.b16 %v577, %v577
      %v594 = vpack.c.b16 %v578, %v578
      %v595 = vpack.c.b16 %v579, %v579
      %v596 = vpack.c.b16 %v580, %v580
      %v597 = vpack.c.b16 %v581, %v581
      %v598 = vpack.c.b16 %v582, %v582
      %v599 = vpack.c.b16 %v583, %v583
      %v600 = vpack.c.b16 %v584, %v584
      %v601 = vpack.c.b16 %v585, %v585
      %v602 = vpack.c.b16 %v586, %v586
      %v603 = vpack.c.b16 %v587, %v587
      %v604 = vpack.c.b16 %v588, %v588
      %vm621 = vcmask 781312
      %622 = vst.msk [vmem:[%s240] sm:$0xf] %vm621, %v589
      %623 = vst.msk [vmem:[%s240 + $0x4] sm:$0xf] %vm621, %v590
      %624 = vst.msk [vmem:[%s240 + $0x8] sm:$0xf] %vm621, %v591
      %625 = vst.msk [vmem:[%s240 + $0xc] sm:$0xf] %vm621, %v592
      %626 = vst.msk [vmem:[%s240 + $0x10] sm:$0xf] %vm621, %v593
      %627 = vst.msk [vmem:[%s240 + $0x14] sm:$0xf] %vm621, %v594
      %628 = vst.msk [vmem:[%s240 + $0x18] sm:$0xf] %vm621, %v595
      %629 = vst.msk [vmem:[%s240 + $0x1c] sm:$0xf] %vm621, %v596
      %630 = vst.msk [vmem:[%s240 + $0x20] sm:$0xf] %vm621, %v597
      %631 = vst.msk [vmem:[%s240 + $0x24] sm:$0xf] %vm621, %v598
      %632 = vst.msk [vmem:[%s240 + $0x28] sm:$0xf] %vm621, %v599
      %633 = vst.msk [vmem:[%s240 + $0x2c] sm:$0xf] %vm621, %v600
      %634 = vst.msk [vmem:[%s240 + $0x30] sm:$0xf] %vm621, %v601
      %635 = vst.msk [vmem:[%s240 + $0x34] sm:$0xf] %vm621, %v602
      %636 = vst.msk [vmem:[%s240 + $0x38] sm:$0xf] %vm621, %v603
      %637 = vst.msk [vmem:[%s240 + $0x3c] sm:$0xf] %vm621, %v604
      %s638 = smul.u32 16, %s20
      %p639 = scmp.lt.s32.totalorder %s19, 1
      %s640 = scalar_select %p639, %s19, 1
      %p641 = scmp.lt.s32.totalorder %s638, 31
      %s642 = scalar_select %p641, %s638, 31
      %p643 = scmp.lt.s32.totalorder %s21, 0
      %s644 = scalar_select %p643, %s21, 0
      %s645 = sadd.s32 %s644, %s642
      %s646 = smul.addr %s640, 32
      %s647 = sadd.s32 %s645, %s646
      %s648 = smul.addr %s647, 4
      %s649 = scalar_lea.vmem %s3, %s648
      // Predicated region
      $region33: #{tpu_custom_call.1} parent=31 // pred_check
        %p650 = pneg %p130
      $region34: #{tpu_custom_call.1} parent=31 // pred_check_branch
        %652 = sbr.rel (%p650) target = $region36
      $region35: #{tpu_custom_call.1} parent=31 // pred_region
        %s653 = smul.u32 16, %s20
      $region36: #{tpu_custom_call.1} parent=31 // pred_fallthru
        _
    $region32: #{tpu_custom_call.1} parent=5 // pred_fallthru
      _
    %p654 = scmp.le.s32.totalorder 2, %s9
    // Predicated region
    $region37: #{tpu_custom_call.1} parent=5 // pred_check
      %p655 = pneg %p654
    $region38: #{tpu_custom_call.1} parent=5 // pred_check_branch
      %657 = sbr.rel (%p655) target = $region40
    $region39: #{tpu_custom_call.1} parent=5 // pred_region
      %s658 = ssub.s32 %s9, 2
      // Predicated region
      $region41: #{tpu_custom_call.1} parent=39 // pred_check
        %p659 = pneg %p136
      $region42: #{tpu_custom_call.1} parent=39 // pred_check_branch
        %661 = sbr.rel (%p659) target = $region44
      $region43: #{tpu_custom_call.1} parent=39 // pred_region
        %s662 = smul.u32 16, %s23
        %p663 = scmp.lt.s32.totalorder %s22, 1
        %s664 = scalar_select %p663, %s22, 1
        %p665 = scmp.lt.s32.totalorder %s662, 31
        %s666 = scalar_select %p665, %s662, 31
        %p667 = scmp.lt.s32.totalorder %s24, 0
        %s668 = scalar_select %p667, %s24, 0
        %s669 = sadd.s32 %s668, %s666
        %s670 = smul.addr %s664, 32
        %s671 = sadd.s32 %s669, %s670
        %s672 = smul.addr %s671, 4
        %s673 = scalar_lea.vmem %s3, %s672
      $region44: #{tpu_custom_call.1} parent=39 // pred_fallthru
        _
    $region40: #{tpu_custom_call.1} parent=5 // pred_fallthru
      _
  $region6: #{tpu_custom_call.1} parent=0 // loop_footer
    %s13 = sadd.s32 1, %s9
  $region7: #{tpu_custom_call.1} parent=0 // loop_footer_branch
    %8 = sbr.rel target = $region3
  $region8: #{tpu_custom_call.1} parent=0 // loop_exit
    _

</llo_original>
